<compile_context>
chip_gen: v7x
topology: tpu7x:2x2x1
jax: 0.10.0
libtpu: 0.0.40
codegen_flags: <defaults>
</compile_context>

<pallas_src>
import functools

import jax
import jax.numpy as jnp
from jax.experimental import pallas as pl
from jax.experimental.pallas import tpu as pltpu

_LANE = 128
_SUBLANE = 8
# ~1 MiB of f32 per channel per grid step (≈2 MiB per input block, ≈8 MiB of
# double-buffered VMEM total).
_MAX_BLOCK_ELEMS = 256 * 1024


def _cdiv(a, b):
    return -(-a // b)


def _round_up(x, m):
    return ((x + m - 1) // m) * m


def _consistent_dice_kernel(clean_ref, aug_ref, iou_ref, inter_acc, sum_acc,
                            *, smooth, total_rows, need_row_mask):
    ri = pl.program_id(1)
    nr = pl.num_programs(1)

    @pl.when(ri == 0)
    def _():
        inter_acc[...] = jnp.zeros_like(inter_acc)
        sum_acc[...] = jnp.zeros_like(sum_acc)

    # Block: (b_tile, 2, r_tile, L); channel 0 = background, 1 = foreground.
    c = clean_ref[...].astype(jnp.float32)
    a = aug_ref[...].astype(jnp.float32)

    # Foreground softmax prob via sigmoid of the logit difference.
    # exp overflow -> inf -> reciprocal -> 0; underflow -> 0 -> prob 1 (no NaN).
    # approx=True routes the reciprocal to the otherwise-idle EUP slot.
    pc = pl.reciprocal(1.0 + jnp.exp(c[:, 0] - c[:, 1]), approx=True)
    pa = pl.reciprocal(1.0 + jnp.exp(a[:, 0] - a[:, 1]), approx=True)

    inter_part = pc * pa          # (b_tile, r_tile, L)
    sum_part = pc + pa

    if need_row_mask:
        # Ragged last row-tile: out-of-range rows hold undefined data (Pallas
        # boundary blocks), so mask at the accumulation with jnp.where.
        b_tile, r_tile, lanes = inter_part.shape
        row_ids = jax.lax.broadcasted_iota(jnp.int32, (b_tile, r_tile, lanes), 1)
        valid = (ri * r_tile + row_ids) < total_rows
        inter_part = jnp.where(valid, inter_part, 0.0)
        sum_part = jnp.where(valid, sum_part, 0.0)

    # Per-step row reduction; lanes stay resident in (b_tile, 1, L)
    # accumulators until the final step.
    inter_acc[...] += inter_part.sum(axis=1, keepdims=True)
    sum_acc[...] += sum_part.sum(axis=1, keepdims=True)

    @pl.when(ri == nr - 1)
    def _():
        inter_t = jnp.sum(inter_acc[...], axis=2, keepdims=True)   # (b_tile,1,1)
        union = jnp.sum(sum_acc[...], axis=2, keepdims=True) - inter_t
        iou = (inter_t + jnp.float32(smooth)) / (union + jnp.float32(smooth))
        iou_ref[...] = iou.astype(iou_ref.dtype)


def consistent_dice_loss(pred_clean, pred_aug, scale_factor=1.0, smooth=1.0,
                         *, max_block_elems=_MAX_BLOCK_ELEMS):
    """Pallas TPU forward pass of ConsistentDiceLoss. Returns a scalar f32.

    Inputs may be float32 or bfloat16 (bf16 halves HBM traffic; accumulation
    is always f32 in-kernel).
    """
    # TODO(synk): forward-only (pallas_call has no autodiff rule); wrap with
    # jax.custom_vjp before using as a training loss that back-props into
    # pred_aug.
    pred_clean = jax.lax.stop_gradient(pred_clean)   # torch .detach()

    B, C, H, W = pred_clean.shape
    assert C == 2, "ConsistentDiceLoss expects 2 channels (bg, fg)"
    assert pred_aug.shape == pred_clean.shape

    # ---- zero-copy spatial view --------------------------------------------
    n = H * W
    if n % _LANE == 0:
        rows, lanes = n // _LANE, _LANE          # lane-dense (rows, 128) slab
    else:
        rows, lanes = H, W                       # direct view, W on lanes
    x_clean = pred_clean.reshape(B, 2, rows, lanes)   # metadata-only reshape
    x_aug = pred_aug.reshape(B, 2, rows, lanes)

    # ---- balanced tiling -----------------------------------------------------
    itemsize = jnp.dtype(pred_clean.dtype).itemsize
    elem_budget = max(1, (max_block_elems * 4) // max(itemsize, 1))
    max_r_tile = max(_SUBLANE, elem_budget // lanes)
    num_r_tiles = _cdiv(rows, max_r_tile)
    if num_r_tiles <= 1:
        r_tile = rows
        num_r_tiles = 1
        # Small images: fold several batch elements into one grid step so the
        # fixed per-step overhead is amortized.
        b_tile = max(1, min(B, elem_budget // max(rows * lanes, 1)))
    else:
        # Balanced row tiles (last tile wastes < 8 rows), multiples of 8.
        r_tile = _round_up(_cdiv(rows, num_r_tiles), _SUBLANE)
        num_r_tiles = _cdiv(rows, r_tile)
        b_tile = 1
    num_b_tiles = _cdiv(B, b_tile)
    need_row_mask = (rows % r_tile) != 0

    # TODO(synk): for B == 1 on v7x, additionally split the row axis into an
    # outer "parallel" dim with per-split partial sums so both TensorCores run.

    kernel = functools.partial(
        _consistent_dice_kernel,
        smooth=float(smooth),
        total_rows=rows,
        need_row_mask=need_row_mask,
    )

    iou = pl.pallas_call(
        kernel,
        out_shape=jax.ShapeDtypeStruct((B, 1, 1), jnp.float32),
        grid_spec=pltpu.PrefetchScalarGridSpec(
            num_scalar_prefetch=0,
            grid=(num_b_tiles, num_r_tiles),
            in_specs=[
                pl.BlockSpec((b_tile, 2, r_tile, lanes),
                             lambda bi, ri: (bi, 0, ri, 0)),
                pl.BlockSpec((b_tile, 2, r_tile, lanes),
                             lambda bi, ri: (bi, 0, ri, 0)),
            ],
            out_specs=pl.BlockSpec((b_tile, 1, 1), lambda bi, ri: (bi, 0, 0)),
            scratch_shapes=[
                pltpu.VMEM((b_tile, 1, lanes), jnp.float32),  # intersection
                pltpu.VMEM((b_tile, 1, lanes), jnp.float32),  # sum(pc)+sum(pa)
            ],
        ),
        compiler_params=pltpu.CompilerParams(
            dimension_semantics=("parallel", "arbitrary"),
        ),
    )(x_clean, x_aug)

    mean_iou = jnp.mean(iou[:, 0, 0])
    return (1.0 - mean_iou) * jnp.float32(scale_factor)


def _reference_loss(pred_clean, pred_aug, scale_factor=1.0, smooth=1.0):
    """Pure-JAX reference mirroring the PyTorch module (math in f32)."""
    pred_clean = jax.lax.stop_gradient(pred_clean).astype(jnp.float32)
    pred_aug = pred_aug.astype(jnp.float32)
    prob_clean = jax.nn.softmax(pred_clean, axis=1)
    prob_aug = jax.nn.softmax(pred_aug, axis=1)
    fc = prob_clean[:, 1].reshape(pred_clean.shape[0], -1)
    fa = prob_aug[:, 1].reshape(pred_aug.shape[0], -1)
    inter = jnp.sum(fc * fa, axis=1)
    union = jnp.sum(fc, axis=1) + jnp.sum(fa, axis=1) - inter
    iou = (inter + smooth) / (union + smooth)
    return (1.0 - jnp.mean(iou)) * scale_factor


if __name__ == "__main__":
    key = jax.random.PRNGKey(0)
    # The EUP approx reciprocal carries ~1e-4 relative error per pixel, so
    # compare against the exact softmax reference with a loosened tolerance.
    TOL = dict(atol=5e-3, rtol=5e-3)

    k1, k2, k3, k4, k5, k6 = jax.random.split(key, 6)

    # Case 1: small square image (lane-dense (rows,128) view + batch folding).
    B, C, H, W = 2, 2, 16, 16
    pc1 = jax.random.normal(k1, (B, C, H, W), dtype=jnp.float32)
    pa1 = jax.random.normal(k2, (B, C, H, W), dtype=jnp.float32)
    loss1 = jax.block_until_ready(consistent_dice_loss(pc1, pa1, 1.0, 1.0))
    ref1 = _reference_loss(pc1, pa1, 1.0, 1.0)
    assert jnp.isfinite(loss1), loss1
    assert jnp.allclose(loss1, ref1, **TOL), (loss1, ref1)

    # Case 2: H*W % 128 != 0 (direct (H, W) view, zero-copy, no padding pass)
    # and non-unit scale_factor.
    pc2 = jax.random.normal(k3, (2, 2, 24, 40), dtype=jnp.float32)
    pa2 = jax.random.normal(k4, (2, 2, 24, 40), dtype=jnp.float32)
    loss2 = jax.block_until_ready(consistent_dice_loss(pc2, pa2, 0.5, 1.0))
    ref2 = _reference_loss(pc2, pa2, 0.5, 1.0)
    assert jnp.allclose(loss2, ref2, **TOL), (loss2, ref2)

    # Case 3: force multi-tile rows with a ragged last tile (exercises the
    # in-kernel row masking + cross-step accumulation) via a tiny block budget.
    pc3 = jax.random.normal(k5, (2, 2, 48, 48), dtype=jnp.float32)
    pa3 = jax.random.normal(k6, (2, 2, 48, 48), dtype=jnp.float32)
    loss3 = jax.block_until_ready(
        consistent_dice_loss(pc3, pa3, 1.0, 1.0, max_block_elems=1024))
    ref3 = _reference_loss(pc3, pa3, 1.0, 1.0)
    assert jnp.allclose(loss3, ref3, **TOL), (loss3, ref3)

    # Case 4: bfloat16 logits (half the HBM traffic; f32 accumulation).
    loss4 = jax.block_until_ready(
        consistent_dice_loss(pc1.astype(jnp.bfloat16), pa1.astype(jnp.bfloat16)))
    ref4 = _reference_loss(pc1.astype(jnp.bfloat16), pa1.astype(jnp.bfloat16))
    assert jnp.allclose(loss4, ref4, **TOL), (loss4, ref4)

    print("KERNEL_OK")
</pallas_src>

<mosaic_0001>
module attributes {stable_mosaic.version = 11 : i64} {
  func.func @_consistent_dice_kernel(%arg0: i32, %arg1: i32, %arg2: memref<2x2x2x128xf32, #tpu.memory_space<vmem>>, %arg3: memref<2x2x2x128xf32, #tpu.memory_space<vmem>>, %arg4: memref<2x1x1xf32, #tpu.memory_space<vmem>>, %arg5: memref<2x1x128xf32, #tpu.memory_space<vmem>>, %arg6: memref<2x1x128xf32, #tpu.memory_space<vmem>>) attributes {dimension_semantics = [#tpu.dimension_semantics<parallel>, #tpu.dimension_semantics<arbitrary>], iteration_bounds = array<i64: 1, 1>, scalar_prefetch = 0 : i64, scratch_operands = 2 : i64, tpu.core_type = #tpu.core_type<tc>, window_params = [{transform_indices = @transform_0, window_bounds = array<i64: 2, 2, 2, 128>}, {transform_indices = @transform_1, window_bounds = array<i64: 2, 2, 2, 128>}, {transform_indices = @transform_2, window_bounds = array<i64: 2, 1, 1>}]} {
    %c0_i32 = arith.constant 0 : i32
    %0 = arith.cmpi eq, %arg1, %c0_i32 : i32
    %1 = arith.extui %0 : i1 to i32
    %c0_i32_0 = arith.constant 0 : i32
    %2 = arith.cmpi ne, %1, %c0_i32_0 : i32
    scf.if %2 {
      %cst_25 = arith.constant 0.000000e+00 : f32
      %38 = vector.broadcast %cst_25 : f32 to vector<2x1x128xf32>
      %c0_26 = arith.constant 0 : index
      %c0_27 = arith.constant 0 : index
      %c0_28 = arith.constant 0 : index
      %39 = vector.load %arg5[%c0_26, %c0_27, %c0_28] : memref<2x1x128xf32, #tpu.memory_space<vmem>>, vector<2x1x128xf32>
      tpu.vector_store %arg5[%c0_26, %c0_27, %c0_28], %38 {strides = array<i32>} : memref<2x1x128xf32, #tpu.memory_space<vmem>>, vector<2x1x128xf32>,
      %cst_29 = arith.constant 0.000000e+00 : f32
      %40 = vector.broadcast %cst_29 : f32 to vector<2x1x128xf32>
      %c0_30 = arith.constant 0 : index
      %c0_31 = arith.constant 0 : index
      %c0_32 = arith.constant 0 : index
      %41 = vector.load %arg6[%c0_30, %c0_31, %c0_32] : memref<2x1x128xf32, #tpu.memory_space<vmem>>, vector<2x1x128xf32>
      tpu.vector_store %arg6[%c0_30, %c0_31, %c0_32], %40 {strides = array<i32>} : memref<2x1x128xf32, #tpu.memory_space<vmem>>, vector<2x1x128xf32>,
    } else {
    }
    %c0 = arith.constant 0 : index
    %c0_1 = arith.constant 0 : index
    %c0_2 = arith.constant 0 : index
    %c0_3 = arith.constant 0 : index
    %3 = vector.load %arg2[%c0, %c0_1, %c0_2, %c0_3] : memref<2x2x2x128xf32, #tpu.memory_space<vmem>>, vector<2x2x2x128xf32>
    %c0_4 = arith.constant 0 : index
    %c0_5 = arith.constant 0 : index
    %c0_6 = arith.constant 0 : index
    %c0_7 = arith.constant 0 : index
    %4 = vector.load %arg3[%c0_4, %c0_5, %c0_6, %c0_7] : memref<2x2x2x128xf32, #tpu.memory_space<vmem>>, vector<2x2x2x128xf32>
    %5 = vector.extract_strided_slice %3 {offsets = [0, 0, 0, 0], sizes = [2, 1, 2, 128], strides = [1, 1, 1, 1]} : vector<2x2x2x128xf32> to vector<2x1x2x128xf32>
    %6 = vector.shape_cast %5 : vector<2x1x2x128xf32> to vector<2x2x128xf32>
    %7 = vector.extract_strided_slice %3 {offsets = [0, 1, 0, 0], sizes = [2, 1, 2, 128], strides = [1, 1, 1, 1]} : vector<2x2x2x128xf32> to vector<2x1x2x128xf32>
    %8 = vector.shape_cast %7 : vector<2x1x2x128xf32> to vector<2x2x128xf32>
    %9 = arith.subf %6, %8 : vector<2x2x128xf32>
    %10 = math.exp %9 : vector<2x2x128xf32>
    %cst = arith.constant 1.000000e+00 : f32
    %11 = vector.broadcast %cst : f32 to vector<2x2x128xf32>
    %12 = arith.addf %11, %10 : vector<2x2x128xf32>
    %13 = tpu.reciprocal %12 {approx = true} : vector<2x2x128xf32> -> vector<2x2x128xf32>
    %14 = vector.extract_strided_slice %4 {offsets = [0, 0, 0, 0], sizes = [2, 1, 2, 128], strides = [1, 1, 1, 1]} : vector<2x2x2x128xf32> to vector<2x1x2x128xf32>
    %15 = vector.shape_cast %14 : vector<2x1x2x128xf32> to vector<2x2x128xf32>
    %16 = vector.extract_strided_slice %4 {offsets = [0, 1, 0, 0], sizes = [2, 1, 2, 128], strides = [1, 1, 1, 1]} : vector<2x2x2x128xf32> to vector<2x1x2x128xf32>
    %17 = vector.shape_cast %16 : vector<2x1x2x128xf32> to vector<2x2x128xf32>
    %18 = arith.subf %15, %17 : vector<2x2x128xf32>
    %19 = math.exp %18 : vector<2x2x128xf32>
    %cst_8 = arith.constant 1.000000e+00 : f32
    %20 = vector.broadcast %cst_8 : f32 to vector<2x2x128xf32>
    %21 = arith.addf %20, %19 : vector<2x2x128xf32>
    %22 = tpu.reciprocal %21 {approx = true} : vector<2x2x128xf32> -> vector<2x2x128xf32>
    %23 = arith.mulf %13, %22 : vector<2x2x128xf32>
    %24 = arith.addf %13, %22 : vector<2x2x128xf32>
    %c0_9 = arith.constant 0 : index
    %c0_10 = arith.constant 0 : index
    %c0_11 = arith.constant 0 : index
    %25 = vector.load %arg5[%c0_9, %c0_10, %c0_11] : memref<2x1x128xf32, #tpu.memory_space<vmem>>, vector<2x1x128xf32>
    %cst_12 = arith.constant dense<0.000000e+00> : vector<2x128xf32>
    %26 = vector.multi_reduction <add>, %23, %cst_12 [1] : vector<2x2x128xf32> to vector<2x128xf32>
    %27 = vector.shape_cast %26 : vector<2x128xf32> to vector<2x1x128xf32>
    %28 = arith.addf %25, %27 : vector<2x1x128xf32>
    %c0_13 = arith.constant 0 : index
    %c0_14 = arith.constant 0 : index
    %c0_15 = arith.constant 0 : index
    %29 = vector.load %arg5[%c0_13, %c0_14, %c0_15] : memref<2x1x128xf32, #tpu.memory_space<vmem>>, vector<2x1x128xf32>
    tpu.vector_store %arg5[%c0_13, %c0_14, %c0_15], %28 {strides = array<i32>} : memref<2x1x128xf32, #tpu.memory_space<vmem>>, vector<2x1x128xf32>,
    %c0_16 = arith.constant 0 : index
    %c0_17 = arith.constant 0 : index
    %c0_18 = arith.constant 0 : index
    %30 = vector.load %arg6[%c0_16, %c0_17, %c0_18] : memref<2x1x128xf32, #tpu.memory_space<vmem>>, vector<2x1x128xf32>
    %cst_19 = arith.constant dense<0.000000e+00> : vector<2x128xf32>
    %31 = vector.multi_reduction <add>, %24, %cst_19 [1] : vector<2x2x128xf32> to vector<2x128xf32>
    %32 = vector.shape_cast %31 : vector<2x128xf32> to vector<2x1x128xf32>
    %33 = arith.addf %30, %32 : vector<2x1x128xf32>
    %c0_20 = arith.constant 0 : index
    %c0_21 = arith.constant 0 : index
    %c0_22 = arith.constant 0 : index
    %34 = vector.load %arg6[%c0_20, %c0_21, %c0_22] : memref<2x1x128xf32, #tpu.memory_space<vmem>>, vector<2x1x128xf32>
    tpu.vector_store %arg6[%c0_20, %c0_21, %c0_22], %33 {strides = array<i32>} : memref<2x1x128xf32, #tpu.memory_space<vmem>>, vector<2x1x128xf32>,
    %c0_i32_23 = arith.constant 0 : i32
    %35 = arith.cmpi eq, %arg1, %c0_i32_23 : i32
    %36 = arith.extui %35 : i1 to i32
    %c0_i32_24 = arith.constant 0 : i32
    %37 = arith.cmpi ne, %36, %c0_i32_24 : i32
    scf.if %37 {
      %c0_25 = arith.constant 0 : index
      %c0_26 = arith.constant 0 : index
      %c0_27 = arith.constant 0 : index
      %38 = vector.load %arg5[%c0_25, %c0_26, %c0_27] : memref<2x1x128xf32, #tpu.memory_space<vmem>>, vector<2x1x128xf32>
      %cst_28 = arith.constant dense<0.000000e+00> : vector<2x1xf32>
      %39 = vector.multi_reduction <add>, %38, %cst_28 [2] : vector<2x1x128xf32> to vector<2x1xf32>
      %40 = vector.shape_cast %39 : vector<2x1xf32> to vector<2x1x1xf32>
      %c0_29 = arith.constant 0 : index
      %c0_30 = arith.constant 0 : index
      %c0_31 = arith.constant 0 : index
      %41 = vector.load %arg6[%c0_29, %c0_30, %c0_31] : memref<2x1x128xf32, #tpu.memory_space<vmem>>, vector<2x1x128xf32>
      %cst_32 = arith.constant dense<0.000000e+00> : vector<2x1xf32>
      %42 = vector.multi_reduction <add>, %41, %cst_32 [2] : vector<2x1x128xf32> to vector<2x1xf32>
      %43 = vector.shape_cast %42 : vector<2x1xf32> to vector<2x1x1xf32>
      %44 = arith.subf %43, %40 : vector<2x1x1xf32>
      %cst_33 = arith.constant 1.000000e+00 : f32
      %45 = vector.broadcast %cst_33 : f32 to vector<2x1x1xf32>
      %46 = arith.addf %40, %45 : vector<2x1x1xf32>
      %cst_34 = arith.constant 1.000000e+00 : f32
      %47 = vector.broadcast %cst_34 : f32 to vector<2x1x1xf32>
      %48 = arith.addf %44, %47 : vector<2x1x1xf32>
      %49 = arith.divf %46, %48 : vector<2x1x1xf32>
      %c0_35 = arith.constant 0 : index
      %c0_36 = arith.constant 0 : index
      %c0_37 = arith.constant 0 : index
      %50 = vector.load %arg4[%c0_35, %c0_36, %c0_37] : memref<2x1x1xf32, #tpu.memory_space<vmem>>, vector<2x1x1xf32>
      tpu.vector_store %arg4[%c0_35, %c0_36, %c0_37], %49 {strides = array<i32>} : memref<2x1x1xf32, #tpu.memory_space<vmem>>, vector<2x1x1xf32>,
    } else {
    }
    return
  }
  func.func @transform_0(%arg0: i32, %arg1: i32) -> (i32, i32, i32, i32) {
    %c0_i32 = arith.constant 0 : i32
    %c0_i32_0 = arith.constant 0 : i32
    %c0_i32_1 = arith.constant 0 : i32
    return %arg0, %c0_i32, %arg1, %c0_i32_0 : i32, i32, i32, i32
  }
  func.func @transform_1(%arg0: i32, %arg1: i32) -> (i32, i32, i32, i32) {
    %c0_i32 = arith.constant 0 : i32
    %c0_i32_0 = arith.constant 0 : i32
    %c0_i32_1 = arith.constant 0 : i32
    return %arg0, %c0_i32, %arg1, %c0_i32_0 : i32, i32, i32, i32
  }
  func.func @transform_2(%arg0: i32, %arg1: i32) -> (i32, i32, i32) {
    %c0_i32 = arith.constant 0 : i32
    %c0_i32_0 = arith.constant 0 : i32
    %c0_i32_1 = arith.constant 0 : i32
    return %arg0, %c0_i32, %c0_i32_0 : i32, i32, i32
  }
}

</mosaic_0001>

<llo_original>
// kernel: tpu_custom_call.1
$region0: #{tpu_custom_call.1}
  #allocation0 [shape = 'u32[]', space=smem, size = 0x4, offset = 0x4, fixed_abs, tag = 'smem constant byte address 0x4 - core index']
  #allocation1 [shape = 'u32[144,128]{1,0:T(1,128)}', space=vmem, size = 0x12000, scoped, tag = 'internal scratch']
  #allocation2 [shape = 'f32[2,1,128]{2,1,0:T(1,128)}', space=vmem, size = 0x400, scoped, tag = 'scratch operand']
  #allocation3 [shape = 'f32[2,1,128]{2,1,0:T(1,128)}', space=vmem, size = 0x400, scoped, tag = 'scratch operand']
  %s0 = inlined_call_operand.hbm [shape: f32[2,2,2,128], index: 0, kind: input, shape index: {}]
  %s1 = inlined_call_operand.hbm [shape: f32[2,2,2,128], index: 1, kind: input, shape index: {}]
  %s2 = inlined_call_operand.vmem [shape: f32[2,1,1], index: 2, kind: output, shape index: {}]
  %s3 = sld [smem:[#allocation0]]
  $region34: #{tpu_custom_call.1} parent=0
    _
  %s5 = ssub.s32 1, %s3
  %s6 = scalar_select 0, %s5, %s3
  $region1: #{tpu_custom_call.1} parent=0
    #allocation4 [shape = 'u8[4096]{0}', space=vmem, size = 0x1000, scoped, tag = 'input window, operand 0, single buffered']
    #allocation5 [shape = 's32[1]{0}', space=sflag, size = 0x4, scoped, tag = 'scoped memory for tpu_custom_call.1']
    #allocation6 [shape = 'u8[4096]{0}', space=vmem, size = 0x1000, scoped, tag = 'input window, operand 1, single buffered']
    #allocation7 [shape = 's32[1]{0}', space=sflag, size = 0x4, scoped, tag = 'scoped memory for tpu_custom_call.1']
    %7 = vsyncpa [#allocation5], 0
    %8 = vsyncpa [#allocation7], 0
    // Predicated region
    $region2: #{tpu_custom_call.1} parent=1 // pred_check
      _
    $region3: #{tpu_custom_call.1} parent=1 // pred_check_branch
      %10 = sbr.rel (0) target = $region5
    $region4: #{tpu_custom_call.1} parent=1 // pred_region
      %s12 = ssub.s32 128, 128
      %13 = vsyncadd [#allocation5], %s12
      %s14 = sshll.u32 [#allocation4], 4
      %s15 = int_to_ptr.vmem [resolvable:$true] %s14
      %20 = dma.hbm_to_vmem [thread:$0]  %s0, 128, %s15, [#allocation5], 32, 32, 2
    $region5: #{tpu_custom_call.1} parent=1 // pred_fallthru
      _
    // Predicated region
    $region6: #{tpu_custom_call.1} parent=1 // pred_check
      _
    $region7: #{tpu_custom_call.1} parent=1 // pred_check_branch
      %22 = sbr.rel (0) target = $region9
    $region8: #{tpu_custom_call.1} parent=1 // pred_region
      %s24 = ssub.s32 128, 128
      %25 = vsyncadd [#allocation7], %s24
      %s26 = sshll.u32 [#allocation6], 4
      %s27 = int_to_ptr.vmem [resolvable:$true] %s26
      %32 = dma.hbm_to_vmem [thread:$0]  %s1, 128, %s27, [#allocation7], 32, 32, 2
    $region9: #{tpu_custom_call.1} parent=1 // pred_fallthru
      _
    // Predicated region
    $region10: #{tpu_custom_call.1} parent=1 // pred_check
      _
    $region11: #{tpu_custom_call.1} parent=1 // pred_check_branch
      %34 = sbr.rel (0) target = $region13
    $region12: #{tpu_custom_call.1} parent=1 // pred_region
      %35 = dma.done [#allocation5], 128
    $region13: #{tpu_custom_call.1} parent=1 // pred_fallthru
      _
    // Predicated region
    $region14: #{tpu_custom_call.1} parent=1 // pred_check
      _
    $region15: #{tpu_custom_call.1} parent=1 // pred_check_branch
      %37 = sbr.rel (0) target = $region17
    $region16: #{tpu_custom_call.1} parent=1 // pred_region
      %38 = dma.done [#allocation7], 128
    $region17: #{tpu_custom_call.1} parent=1 // pred_fallthru
      _
    %p39 = scmp.eq.s32.totalorder 0, 0
    // Predicated region
    $region18: #{tpu_custom_call.1} parent=1 // pred_check
      %p40 = pneg %p39
    $region19: #{tpu_custom_call.1} parent=1 // pred_check_branch
      %42 = sbr.rel (%p40) target = $region21
    $region20: #{tpu_custom_call.1} parent=1 // pred_region
      %43 = vst [vmem:[#allocation2] sm:$0x1] 0.0
      %44 = vst [vmem:[#allocation2 + $0x1] sm:$0x1] 0.0
      %45 = vst [vmem:[#allocation3] sm:$0x1] 0.0
      %46 = vst [vmem:[#allocation3 + $0x1] sm:$0x1] 0.0
    $region21: #{tpu_custom_call.1} parent=1 // pred_fallthru
      _
    %v47 = vld [vmem:[#allocation4] sm:$0x3]
    %v48 = vld [vmem:[#allocation4 + $0x2] sm:$0x3]
    %v49 = vld [vmem:[#allocation4 + $0x4] sm:$0x3]
    %v50 = vld [vmem:[#allocation4 + $0x6] sm:$0x3]
    %v51 = vld [vmem:[#allocation6] sm:$0x3]
    %v52 = vld [vmem:[#allocation6 + $0x2] sm:$0x3]
    %v53 = vld [vmem:[#allocation6 + $0x4] sm:$0x3]
    %v54 = vld [vmem:[#allocation6 + $0x6] sm:$0x3]
    %v55 = vsub.f32 %v47, %v48
    %v56 = vsub.f32 %v49, %v50
    %v57 = vmul.f32 %v55, 1.442695
    %v58 = vpow.pop %v57
    %v59 = vmul.f32 %v56, 1.442695
    %v60 = vpow.pop %v59
    %v61 = vadd.f32 %v58, 1.0
    %v62 = vadd.f32 %v60, 1.0
    %v63 = vrcp.pop %v61
    %v64 = vrcp.pop %v62
    %v65 = vsub.f32 %v51, %v52
    %v66 = vsub.f32 %v53, %v54
    %v67 = vmul.f32 %v65, 1.442695
    %v68 = vpow.pop %v67
    %v69 = vmul.f32 %v66, 1.442695
    %v70 = vpow.pop %v69
    %v71 = vadd.f32 %v68, 1.0
    %v72 = vadd.f32 %v70, 1.0
    %v73 = vrcp.pop %v71
    %v74 = vrcp.pop %v72
    %v75 = vmul.f32 %v63, %v73
    %v76 = vmul.f32 %v64, %v74
    %v77 = vadd.f32 %v63, %v73
    %v78 = vadd.f32 %v64, %v74
    %v79 = vld [vmem:[#allocation2] sm:$0x1]
    %v80 = vld [vmem:[#allocation2 + $0x1] sm:$0x1]
    %vm81 = vcmask 1041408
    %v82 = vsel %vm81, %v75, 0.0
    %v83 = vrot.slane %v82, 4
    %v84 = vadd.f32 %v82, %v83
    %v85 = vrot.slane %v84, 2
    %v86 = vadd.f32 %v84, %v85
    %v87 = vrot.slane %v86, 1
    %v88 = vadd.f32 %v86, %v87
    %v89 = vsel %vm81, %v76, 0.0
    %v90 = vrot.slane %v89, 4
    %v91 = vadd.f32 %v89, %v90
    %v92 = vrot.slane %v91, 2
    %v93 = vadd.f32 %v91, %v92
    %v94 = vrot.slane %v93, 1
    %v95 = vadd.f32 %v93, %v94
    %v96 = vadd.f32 %v79, %v88
    %v97 = vadd.f32 %v80, %v95
    %98 = vst [vmem:[#allocation2] sm:$0x1] %v96
    %99 = vst [vmem:[#allocation2 + $0x1] sm:$0x1] %v97
    %v100 = vld [vmem:[#allocation3] sm:$0x1]
    %v101 = vld [vmem:[#allocation3 + $0x1] sm:$0x1]
    %v102 = vsel %vm81, %v77, 0.0
    %v103 = vrot.slane %v102, 4
    %v104 = vadd.f32 %v102, %v103
    %v105 = vrot.slane %v104, 2
    %v106 = vadd.f32 %v104, %v105
    %v107 = vrot.slane %v106, 1
    %v108 = vadd.f32 %v106, %v107
    %v109 = vsel %vm81, %v78, 0.0
    %v110 = vrot.slane %v109, 4
    %v111 = vadd.f32 %v109, %v110
    %v112 = vrot.slane %v111, 2
    %v113 = vadd.f32 %v111, %v112
    %v114 = vrot.slane %v113, 1
    %v115 = vadd.f32 %v113, %v114
    %v116 = vadd.f32 %v100, %v108
    %v117 = vadd.f32 %v101, %v115
    %118 = vst [vmem:[#allocation3] sm:$0x1] %v116
    %119 = vst [vmem:[#allocation3 + $0x1] sm:$0x1] %v117
    // Predicated region
    $region22: #{tpu_custom_call.1} parent=1 // pred_check
      %p120 = pneg %p39
    $region23: #{tpu_custom_call.1} parent=1 // pred_check_branch
      %122 = sbr.rel (%p120) target = $region25
    $region24: #{tpu_custom_call.1} parent=1 // pred_region
      %v123 = vld [vmem:[#allocation2] sm:$0x1]
      %v124 = vld [vmem:[#allocation2 + $0x1] sm:$0x1]
      %vm125 = vcmask 1040384
      %v126 = vsel %vm125, %v123, 0.0
      %127 = vadd.xlane.f32.xlu0 %v126
      %v128 = vpop.xlane.xlu0 %127
      %v129 = vsel %vm125, %v124, 0.0
      %130 = vadd.xlane.f32.xlu0 %v129
      %v131 = vpop.xlane.xlu0 %130
      %v132 = vld [vmem:[#allocation3] sm:$0x1]
      %v133 = vld [vmem:[#allocation3 + $0x1] sm:$0x1]
      %v134 = vsel %vm125, %v132, 0.0
      %135 = vadd.xlane.f32.xlu0 %v134
      %v136 = vpop.xlane.xlu0 %135
      %v137 = vsel %vm125, %v133, 0.0
      %138 = vadd.xlane.f32.xlu0 %v137
      %v139 = vpop.xlane.xlu0 %138
      %v140 = vsub.f32 %v136, %v128
      %v141 = vsub.f32 %v139, %v131
      %v142 = vadd.f32 %v128, 1.0
      %v143 = vadd.f32 %v131, 1.0
      %v144 = vadd.f32 %v140, 1.0
      %v145 = vadd.f32 %v141, 1.0
      %v146 = vrcp.pop %v144
      %v147 = vmul.f32 %v142, %v146
      %v148 = vrcp.pop %v145
      %v149 = vmul.f32 %v143, %v148
      %vm150 = vcmask 0
      %151 = vst.msk [vmem:[%s2] sm:$0x1] %vm150, %v147
      %152 = vst.msk [vmem:[%s2 + $0x1] sm:$0x1] %vm150, %v149
    $region25: #{tpu_custom_call.1} parent=1 // pred_fallthru
      _
    // Predicated region
    $region26: #{tpu_custom_call.1} parent=1 // pred_check
      _
    $region27: #{tpu_custom_call.1} parent=1 // pred_check_branch
      %154 = sbr.rel (0) target = $region29
    $region28: #{tpu_custom_call.1} parent=1 // pred_region
      _
    $region29: #{tpu_custom_call.1} parent=1 // pred_fallthru
      _
    // Predicated region
    $region30: #{tpu_custom_call.1} parent=1 // pred_check
      _
    $region31: #{tpu_custom_call.1} parent=1 // pred_check_branch
      %156 = sbr.rel (0) target = $region33
    $region32: #{tpu_custom_call.1} parent=1 // pred_region
      _
    $region33: #{tpu_custom_call.1} parent=1 // pred_fallthru
      _
    %157 = vsyncpa [#allocation5], 1
    %158 = vsyncpa [#allocation7], 1

</llo_original>
